<compile_context>
chip_gen: v5e
topology: v5e:2x2
jax: 0.10.0
libtpu: 0.0.40
codegen_flags: <defaults>
</compile_context>

<pallas_src>
import jax
import jax.numpy as jnp
from jax.experimental import pallas as pl
from jax.experimental.pallas import tpu as pltpu

NEG_SLOPE = 0.01  # PyTorch LeakyReLU default negative_slope
_LANE = 128
_SUBLANE = 8


def _round_up(x, m):
    return ((x + m - 1) // m) * m


def _leaky_relu(x):
    # Valid since NEG_SLOPE < 1: a single VPU max instead of compare+select.
    return jnp.maximum(x, NEG_SLOPE * x)


def _make_kernel(F, H_pad, O, offs, compute_dtype):
    """Kernel closure over the static slab layout (all offsets 8-row aligned)."""
    off_w1, off_b1, off_w2, off_b2, off_w3, off_b3 = offs

    def mlp_kernel(x_ref, slab_ref, o_ref):
        # x row tile; cast to bf16 (native MXU) -- accumulation stays f32.
        x = x_ref[...].astype(compute_dtype)                             # (T, F)

        # Weights as bf16, biases as 2-D (1, P) f32 rows (clean sublane broadcast).
        w1 = slab_ref[off_w1:off_w1 + F, :].astype(compute_dtype)        # (F, P)
        b1 = slab_ref[off_b1:off_b1 + 1, :]                              # (1, P)
        w2 = slab_ref[off_w2:off_w2 + H_pad, :].astype(compute_dtype)    # (H_pad, P)
        b2 = slab_ref[off_b2:off_b2 + 1, :]
        w3 = slab_ref[off_w3:off_w3 + H_pad, :].astype(compute_dtype)    # (H_pad, P)
        b3 = slab_ref[off_b3:off_b3 + 1, :]

        h1 = _leaky_relu(jnp.dot(x, w1, preferred_element_type=jnp.float32) + b1)
        # Contract only over the real (padded-to-8) hidden width, not 128 zeros.
        h2 = _leaky_relu(
            jnp.dot(h1[:, :H_pad].astype(compute_dtype), w2,
                    preferred_element_type=jnp.float32) + b2)
        out = jnp.dot(h2[:, :H_pad].astype(compute_dtype), w3,
                      preferred_element_type=jnp.float32) + b3

        # Store only the real O output columns (narrow HBM writeback).
        o_ref[...] = out[:, :O].astype(o_ref.dtype)

    return mlp_kernel


def pack_params(params):
    """Pack w1,b1,w2,b2,w3,b3 (weights stored as (in, out)) into one lane-dense
    f32 slab.  Call once and reuse across forward calls."""
    w1, b1, w2, b2, w3, b3 = (jnp.asarray(params[k], jnp.float32)
                              for k in ("w1", "b1", "w2", "b2", "w3", "b3"))
    F, H = w1.shape
    O = w3.shape[1]
    F_pad = _round_up(F, _SUBLANE)
    H_pad = _round_up(H, _SUBLANE)
    P = max(_round_up(H, _LANE), _round_up(O, _LANE))

    off_w1 = 0
    off_b1 = off_w1 + F_pad
    off_w2 = off_b1 + _SUBLANE
    off_b2 = off_w2 + H_pad
    off_w3 = off_b2 + _SUBLANE
    off_b3 = off_w3 + H_pad
    rows = off_b3 + _SUBLANE

    slab = jnp.zeros((rows, P), jnp.float32)
    slab = slab.at[off_w1:off_w1 + F, :H].set(w1)
    slab = slab.at[off_b1, :H].set(b1.reshape(-1))
    slab = slab.at[off_w2:off_w2 + H, :H].set(w2)
    slab = slab.at[off_b2, :H].set(b2.reshape(-1))
    slab = slab.at[off_w3:off_w3 + H, :O].set(w3)
    slab = slab.at[off_b3, :O].set(b3.reshape(-1))

    return {
        "slab": slab,
        "dims": (F, H, O, F_pad, H_pad, P),
        "offsets": (off_w1, off_b1, off_w2, off_b2, off_w3, off_b3),
    }


def multi_class_classification_forward(x, packed_or_params, tile_n=2048,
                                        compute_dtype=jnp.bfloat16):
    """x: (N, input_features).  packed_or_params: output of pack_params (preferred,
    reuse across calls) or the raw params dict."""
    packed = (packed_or_params if "slab" in packed_or_params
              else pack_params(packed_or_params))
    slab = packed["slab"]
    F, H, O, F_pad, H_pad, P = packed["dims"]
    offs = packed["offsets"]

    N, F_in = x.shape
    assert F_in == F, "input feature mismatch"
    x = x.astype(jnp.float32)  # no-op for f32 inputs

    # Row tile: large to amortize per-step overhead, but guarantee >=2 grid steps
    # whenever N allows so the "parallel" axis shards across v7x's two TCs.
    TILE_N = max(_SUBLANE,
                 min(_round_up(int(tile_n), _SUBLANE),
                     _round_up(-(-N // 2), _SUBLANE)))
    grid = (pl.cdiv(N, TILE_N),)

    kernel = _make_kernel(F, H_pad, O, offs, compute_dtype)

    # Truthful (unpadded) cost hint for XLA's scheduler.
    cost = pl.CostEstimate(
        flops=int(2 * N * (F * H + H * H + H * O)),
        transcendentals=0,
        bytes_accessed=int(4 * (N * F + N * O) + 4 * slab.size),
    )

    return pl.pallas_call(
        kernel,
        out_shape=jax.ShapeDtypeStruct((N, O), jnp.float32),
        grid=grid,
        in_specs=[
            pl.BlockSpec((TILE_N, F), lambda i: (i, 0)),            # row tiles of x
            pl.BlockSpec((slab.shape[0], P), lambda i: (0, 0)),     # resident weights
        ],
        out_specs=pl.BlockSpec((TILE_N, O), lambda i: (i, 0)),      # narrow output
        compiler_params=pltpu.CompilerParams(
            dimension_semantics=("parallel",)),
        cost_estimate=cost,
    )(x, slab)


def init_params(key, input_features, output_features, hidden_units=8):
    """Mimics nn.Linear's U(-1/sqrt(fan_in), 1/sqrt(fan_in)) init.  Weights stored
    as (in, out) so the forward computes x @ W + b directly."""
    ks = jax.random.split(key, 6)

    def linear(kw, kb, fan_in, fan_out):
        bound = 1.0 / jnp.sqrt(jnp.asarray(fan_in, jnp.float32))
        w = jax.random.uniform(kw, (fan_in, fan_out), jnp.float32, -bound, bound)
        b = jax.random.uniform(kb, (fan_out,), jnp.float32, -bound, bound)
        return w, b

    w1, b1 = linear(ks[0], ks[1], input_features, hidden_units)
    w2, b2 = linear(ks[2], ks[3], hidden_units, hidden_units)
    w3, b3 = linear(ks[4], ks[5], hidden_units, output_features)
    return {"w1": w1, "b1": b1, "w2": w2, "b2": b2, "w3": w3, "b3": b3}


def reference_forward(x, p):
    h1 = _leaky_relu(x @ p["w1"] + p["b1"])
    h2 = _leaky_relu(h1 @ p["w2"] + p["b2"])
    return h2 @ p["w3"] + p["b3"]


if __name__ == "__main__":
    key = jax.random.PRNGKey(0)
    k_x, k_p, k_x2 = jax.random.split(key, 3)

    batch = 8
    input_features = 4
    output_features = 4
    hidden_units = 8

    x = jax.random.normal(k_x, (batch, input_features), jnp.float32)
    params = init_params(k_p, input_features, output_features, hidden_units)
    packed = pack_params(params)   # built once, reused across calls

    # 1) Small single-tile case, f32 MXU path -> tight structural correctness check.
    out = jax.block_until_ready(
        multi_class_classification_forward(x, packed, compute_dtype=jnp.float32))
    ref = reference_forward(x, params)
    assert out.shape == (batch, output_features)
    assert jnp.allclose(out, ref, atol=1e-5, rtol=1e-5), "mismatch vs reference (f32)"

    # 2) Multi-tile case (>=2 grid steps, partial last block masked by Pallas),
    #    default bf16 MXU path (f32 accumulation) -> looser tolerance.
    x2 = jax.random.normal(k_x2, (520, input_features), jnp.float32)
    out2 = jax.block_until_ready(multi_class_classification_forward(x2, packed))
    ref2 = reference_forward(x2, params)
    assert out2.shape == (520, output_features)
    assert jnp.allclose(out2, ref2, atol=5e-2, rtol=5e-2), "mismatch vs reference (bf16)"

    print("KERNEL_OK")
</pallas_src>

<mosaic_0001>
module attributes {stable_mosaic.version = 11 : i64} {
  func.func @mlp_kernel(%arg0: i32, %arg1: memref<8x4xf32, #tpu.memory_space<vmem>>, %arg2: memref<48x128xf32, #tpu.memory_space<vmem>>, %arg3: memref<8x4xf32, #tpu.memory_space<vmem>>) attributes {dimension_semantics = [#tpu.dimension_semantics<parallel>], iteration_bounds = array<i64: 1>, scalar_prefetch = 0 : i64, scratch_operands = 0 : i64, tpu.core_type = #tpu.core_type<tc>, window_params = [{transform_indices = @transform_0, window_bounds = array<i64: 8, 4>}, {pipeline_mode = #tpu.pipeline_mode<synchronous>, transform_indices = @transform_1, window_bounds = array<i64: 48, 128>}, {transform_indices = @transform_2, window_bounds = array<i64: 8, 4>}]} {
    %c0 = arith.constant 0 : index
    %c0_0 = arith.constant 0 : index
    %0 = vector.load %arg1[%c0, %c0_0] : memref<8x4xf32, #tpu.memory_space<vmem>>, vector<8x4xf32>
    %c0_1 = arith.constant 0 : index
    %c0_2 = arith.constant 0 : index
    %1 = vector.load %arg2[%c0_1, %c0_2] : memref<48x128xf32, #tpu.memory_space<vmem>>, vector<4x128xf32>
    %c8 = arith.constant 8 : index
    %c0_3 = arith.constant 0 : index
    %2 = vector.load %arg2[%c8, %c0_3] : memref<48x128xf32, #tpu.memory_space<vmem>>, vector<1x128xf32>
    %c16 = arith.constant 16 : index
    %c0_4 = arith.constant 0 : index
    %3 = vector.load %arg2[%c16, %c0_4] : memref<48x128xf32, #tpu.memory_space<vmem>>, vector<8x128xf32>
    %c24 = arith.constant 24 : index
    %c0_5 = arith.constant 0 : index
    %4 = vector.load %arg2[%c24, %c0_5] : memref<48x128xf32, #tpu.memory_space<vmem>>, vector<1x128xf32>
    %c32 = arith.constant 32 : index
    %c0_6 = arith.constant 0 : index
    %5 = vector.load %arg2[%c32, %c0_6] : memref<48x128xf32, #tpu.memory_space<vmem>>, vector<8x128xf32>
    %c40 = arith.constant 40 : index
    %c0_7 = arith.constant 0 : index
    %6 = vector.load %arg2[%c40, %c0_7] : memref<48x128xf32, #tpu.memory_space<vmem>>, vector<1x128xf32>
    %cst = arith.constant dense<0.000000e+00> : vector<8x128xf32>
    %7 = tpu.matmul %0, %1, %cst {dimension_numbers = #tpu.dot_dimension_numbers<[1], [0], [0], [1], [0, 0, 1, 1], [], []>} : vector<8x4xf32>, vector<4x128xf32>, vector<8x128xf32> -> vector<8x128xf32>
    %8 = vector.broadcast %2 : vector<1x128xf32> to vector<8x128xf32>
    %9 = arith.addf %7, %8 : vector<8x128xf32>
    %cst_8 = arith.constant 0.00999999977 : f32
    %10 = vector.broadcast %cst_8 : f32 to vector<8x128xf32>
    %11 = arith.mulf %10, %9 : vector<8x128xf32>
    %12 = arith.maximumf %9, %11 : vector<8x128xf32>
    %13 = vector.extract_strided_slice %12 {offsets = [0, 0], sizes = [8, 8], strides = [1, 1]} : vector<8x128xf32> to vector<8x8xf32>
    %cst_9 = arith.constant dense<0.000000e+00> : vector<8x128xf32>
    %14 = tpu.matmul %13, %3, %cst_9 {dimension_numbers = #tpu.dot_dimension_numbers<[1], [0], [0], [1], [0, 0, 1, 1], [], []>} : vector<8x8xf32>, vector<8x128xf32>, vector<8x128xf32> -> vector<8x128xf32>
    %15 = vector.broadcast %4 : vector<1x128xf32> to vector<8x128xf32>
    %16 = arith.addf %14, %15 : vector<8x128xf32>
    %cst_10 = arith.constant 0.00999999977 : f32
    %17 = vector.broadcast %cst_10 : f32 to vector<8x128xf32>
    %18 = arith.mulf %17, %16 : vector<8x128xf32>
    %19 = arith.maximumf %16, %18 : vector<8x128xf32>
    %20 = vector.extract_strided_slice %19 {offsets = [0, 0], sizes = [8, 8], strides = [1, 1]} : vector<8x128xf32> to vector<8x8xf32>
    %cst_11 = arith.constant dense<0.000000e+00> : vector<8x128xf32>
    %21 = tpu.matmul %20, %5, %cst_11 {dimension_numbers = #tpu.dot_dimension_numbers<[1], [0], [0], [1], [0, 0, 1, 1], [], []>} : vector<8x8xf32>, vector<8x128xf32>, vector<8x128xf32> -> vector<8x128xf32>
    %22 = vector.broadcast %6 : vector<1x128xf32> to vector<8x128xf32>
    %23 = arith.addf %21, %22 : vector<8x128xf32>
    %24 = vector.extract_strided_slice %23 {offsets = [0, 0], sizes = [8, 4], strides = [1, 1]} : vector<8x128xf32> to vector<8x4xf32>
    %c0_12 = arith.constant 0 : index
    %c0_13 = arith.constant 0 : index
    %25 = vector.load %arg3[%c0_12, %c0_13] : memref<8x4xf32, #tpu.memory_space<vmem>>, vector<8x4xf32>
    tpu.vector_store %arg3[%c0_12, %c0_13], %24 {strides = array<i32>} : memref<8x4xf32, #tpu.memory_space<vmem>>, vector<8x4xf32>,
    return
  }
  func.func @transform_0(%arg0: i32) -> (i32, i32) {
    %c0_i32 = arith.constant 0 : i32
    %c0_i32_0 = arith.constant 0 : i32
    return %arg0, %c0_i32 : i32, i32
  }
  func.func @transform_1(%arg0: i32) -> (i32, i32) {
    %c0_i32 = arith.constant 0 : i32
    %c0_i32_0 = arith.constant 0 : i32
    %c0_i32_1 = arith.constant 0 : i32
    return %c0_i32, %c0_i32_0 : i32, i32
  }
  func.func @transform_2(%arg0: i32) -> (i32, i32) {
    %c0_i32 = arith.constant 0 : i32
    %c0_i32_0 = arith.constant 0 : i32
    return %arg0, %c0_i32 : i32, i32
  }
}

</mosaic_0001>

<llo_original>
// kernel: tpu_custom_call.1
$region0: #{tpu_custom_call.1}
  #allocation0 [shape = 'u32[]', space=smem, size = 0x4, offset = 0x4, fixed_abs, tag = 'smem constant byte address 0x4 - core index']
  #allocation1 [shape = 'u32[72,128]{1,0:T(1,128)}', space=vmem, size = 0x9000, scoped, tag = 'internal scratch']
  %s0 = inlined_call_operand.vmem [shape: f32[8,4], index: 0, kind: input, shape index: {}]
  %s1 = inlined_call_operand.hbm [shape: f32[48,128], index: 1, kind: input, shape index: {}]
  %s2 = inlined_call_operand.vmem [shape: f32[8,4], index: 2, kind: output, shape index: {}]
  %s3 = sld [smem:[#allocation0]]
  $region22: #{tpu_custom_call.1} parent=0
    _
  %s5 = ssub.s32 1, %s3
  %s6 = scalar_select 0, %s5, %s3
  $region1: #{tpu_custom_call.1} parent=0
    #allocation2 [shape = 'u8[24576]{0}', space=vmem, size = 0x6000, scoped, tag = 'input window, operand 1, single buffered']
    #allocation3 [shape = 's32[1]{0}', space=sflag, size = 0x4, scoped, tag = 'scoped memory for tpu_custom_call.1']
    %7 = vsyncpa [#allocation3], 0
    // Predicated region
    $region2: #{tpu_custom_call.1} parent=1 // pred_check
      _
    $region3: #{tpu_custom_call.1} parent=1 // pred_check_branch
      %9 = sbr.rel (0) target = $region5
    $region4: #{tpu_custom_call.1} parent=1 // pred_region
      _
    $region5: #{tpu_custom_call.1} parent=1 // pred_fallthru
      _
    // Predicated region
    $region6: #{tpu_custom_call.1} parent=1 // pred_check
      _
    $region7: #{tpu_custom_call.1} parent=1 // pred_check_branch
      %11 = sbr.rel (0) target = $region9
    $region8: #{tpu_custom_call.1} parent=1 // pred_region
      %13 = vsyncadd [#allocation3], 0
      %s14 = sshll.u32 %s1, 4
      %s15 = int_to_ptr.hbm [resolvable:$true] %s14
      %s16 = sshll.u32 [#allocation2], 4
      %s17 = int_to_ptr.vmem [resolvable:$true] %s16
      %22 = dma.hbm_to_vmem [thread:$0]  %s15, 768, %s17, [#allocation3], 128, 128, 8
    $region9: #{tpu_custom_call.1} parent=1 // pred_fallthru
      _
    // Predicated region
    $region10: #{tpu_custom_call.1} parent=1 // pred_check
      _
    $region11: #{tpu_custom_call.1} parent=1 // pred_check_branch
      %24 = sbr.rel (0) target = $region13
    $region12: #{tpu_custom_call.1} parent=1 // pred_region
      %26 = dma.done [#allocation3], 768
    $region13: #{tpu_custom_call.1} parent=1 // pred_fallthru
      _
    %v27 = vld [vmem:[%s0] sm:$0xff]
    %v28 = vld [vmem:[#allocation2] sm:$0xf]
    %v29 = vld [vmem:[#allocation2 + $0x8] sm:$0x1]
    %v30 = vld [vmem:[#allocation2 + $0x10] sm:$0xff]
    %v31 = vld [vmem:[#allocation2 + $0x18] sm:$0x1]
    %v32 = vld [vmem:[#allocation2 + $0x20] sm:$0xff]
    %v33 = vld [vmem:[#allocation2 + $0x28] sm:$0x1]
    %v34 = vperm.slane %v29, 0
    %vm35 = vcmask 31744
    %v37 = vsel %vm35, %v27, 0
    %vm39 = vcmask 1043456
    %v41 = vsel %vm39, %v28, 0
    %43 = vmatpush.msra.mxu0 0.0
    %44 = vmatpush.msra.mxu0 0.0
    %45 = vmatpush.msra.mxu0 0.0
    %46 = vmatpush.msra.mxu0 0.0
    %47 = vmatpush.msra.mxu0 0.0
    %48 = vmatpush.msra.mxu0 0.0
    %49 = vmatpush.msra.mxu0 0.0
    %50 = vmatpush.msra.mxu0 0.0
    %51 = vmatpush.msra.mxu0 0.0
    %52 = vmatpush.msra.mxu0 0.0
    %53 = vmatpush.msra.mxu0 0.0
    %54 = vmatpush.msra.mxu0 0.0
    %55 = vmatpush.msra.mxu0 0.0
    %56 = vmatpush.msra.mxu0 0.0
    %57 = vmatpush.msra.mxu0 0.0
    %58 = vmatpush.msra.mxu0 %v41
    %59 = vmatmul.f32.gmra.mxu0 %v37
    %v60 = vpop.f32.mrf.mxu0
    %v61 = vadd.f32 %v34, %v60
    %62 = vdwg.mxu0
    %v63 = vmul.f32 %v61, 0.01
    %v64 = vmax.f32 %v61, %v63
    %v65 = vperm.slane %v31, 0
    %vm66 = vcmask 64512
    %v68 = vsel %vm66, %v64, 0
    %70 = vmatpush.msra.mxu0 0.0
    %71 = vmatpush.msra.mxu0 0.0
    %72 = vmatpush.msra.mxu0 0.0
    %73 = vmatpush.msra.mxu0 0.0
    %74 = vmatpush.msra.mxu0 0.0
    %75 = vmatpush.msra.mxu0 0.0
    %76 = vmatpush.msra.mxu0 0.0
    %77 = vmatpush.msra.mxu0 0.0
    %78 = vmatpush.msra.mxu0 0.0
    %79 = vmatpush.msra.mxu0 0.0
    %80 = vmatpush.msra.mxu0 0.0
    %81 = vmatpush.msra.mxu0 0.0
    %82 = vmatpush.msra.mxu0 0.0
    %83 = vmatpush.msra.mxu0 0.0
    %84 = vmatpush.msra.mxu0 0.0
    %85 = vmatpush.msra.mxu0 %v30
    %86 = vmatmul.f32.gmra.mxu0 %v68
    %v87 = vpop.f32.mrf.mxu0
    %v88 = vadd.f32 %v65, %v87
    %89 = vdwg.mxu0
    %v90 = vmul.f32 %v88, 0.01
    %v91 = vmax.f32 %v88, %v90
    %v92 = vperm.slane %v33, 0
    %v94 = vsel %vm66, %v91, 0
    %96 = vmatpush.msra.mxu0 0.0
    %97 = vmatpush.msra.mxu0 0.0
    %98 = vmatpush.msra.mxu0 0.0
    %99 = vmatpush.msra.mxu0 0.0
    %100 = vmatpush.msra.mxu0 0.0
    %101 = vmatpush.msra.mxu0 0.0
    %102 = vmatpush.msra.mxu0 0.0
    %103 = vmatpush.msra.mxu0 0.0
    %104 = vmatpush.msra.mxu0 0.0
    %105 = vmatpush.msra.mxu0 0.0
    %106 = vmatpush.msra.mxu0 0.0
    %107 = vmatpush.msra.mxu0 0.0
    %108 = vmatpush.msra.mxu0 0.0
    %109 = vmatpush.msra.mxu0 0.0
    %110 = vmatpush.msra.mxu0 0.0
    %111 = vmatpush.msra.mxu0 %v32
    %112 = vmatmul.f32.gmra.mxu0 %v94
    %v113 = vpop.f32.mrf.mxu0
    %v114 = vadd.f32 %v92, %v113
    %115 = vdwg.mxu0
    %116 = vst.msk [vmem:[%s2] sm:$0xff] %vm35, %v114
    // Predicated region
    $region14: #{tpu_custom_call.1} parent=1 // pred_check
      _
    $region15: #{tpu_custom_call.1} parent=1 // pred_check_branch
      %118 = sbr.rel (0) target = $region17
    $region16: #{tpu_custom_call.1} parent=1 // pred_region
      _
    $region17: #{tpu_custom_call.1} parent=1 // pred_fallthru
      _
    // Predicated region
    $region18: #{tpu_custom_call.1} parent=1 // pred_check
      _
    $region19: #{tpu_custom_call.1} parent=1 // pred_check_branch
      %120 = sbr.rel (0) target = $region21
    $region20: #{tpu_custom_call.1} parent=1 // pred_region
      _
    $region21: #{tpu_custom_call.1} parent=1 // pred_fallthru
      _
    %121 = vsyncpa [#allocation3], 1

</llo_original>
